<compile_context>
chip_gen: v5e
topology: v5e:2x2
jax: 0.10.0
libtpu: 0.0.40
codegen_flags: <defaults>
</compile_context>

<pallas_src>
import functools

import jax
import jax.numpy as jnp
from jax.experimental import pallas as pl
from jax.experimental.pallas import tpu as pltpu


def _kv_kernel(x_ref, wk_ref, wv_ref, bv_ref, k_ref, v_ref, *, k_scale, precision):
    """One (n, b, s) tile: two MXU matmuls + scale/bias epilogue + fused head split.

    x_ref : (1, tS, D)        activations (native dtype)
    wk_ref: (D, tN)           K weight slice, stored transposed [in, out]
    wv_ref: (D, tN)           V weight slice
    bv_ref: (1, tN)           V bias slice
    k_ref : (1, hn, tS, hd)   K output block ([B,H,S,hd] layout, hn = tN // hd)
    v_ref : (1, hn, tS, hd)   V output block
    """
    x = x_ref[0]                                                        # (tS, D)

    k = jnp.dot(x, wk_ref[...], preferred_element_type=jnp.float32,
                precision=precision)                                    # f32 MXU accum
    v = jnp.dot(x, wv_ref[...], preferred_element_type=jnp.float32,
                precision=precision)
    k = k * k_scale                                                     # single VPU mul
    v = v + bv_ref[...].astype(jnp.float32)                             # (1, tN) broadcast add

    _, hn, _, hd = k_ref.shape
    # Fused head split: per-head lane slices -> (tS, hd) stores.  Replaces the wrapper-side
    # [B,S,D] -> [B,H,S,hd] permute (which re-read/re-wrote both outputs through HBM).
    # Slices are lane-aligned whenever hd % 128 == 0.
    for h in range(hn):
        sl = slice(h * hd, (h + 1) * hd)
        k_ref[0, h] = k[:, sl].astype(k_ref.dtype)
        v_ref[0, h] = v[:, sl].astype(v_ref.dtype)


def key_value(x, params, heads, *, block_s=None, block_n=None, compute_dtype=None,
              precision=None):
    """x: [B, S, D] -> (k, v), each [B, heads, S, head_dim] (matches KeyValueModule).

    block_s:       sequence tile (default min(S, 512); 512 = multiple of the 256-wide MXU).
    block_n:       optional output-feature tile for small-VMEM parts (v7x).  Must divide D,
                   be a multiple of head_dim, and (if < D) a multiple of 128 (ideally 256).
    compute_dtype: cast operands at the boundary (e.g. jnp.bfloat16, recommended on v5e).
    precision:     forwarded to the in-kernel dots; pass jax.lax.Precision.HIGHEST for exact
                   fp32 parity with the PyTorch fp32 module on large D (default = HW default).
    """
    if compute_dtype is not None:
        x = x.astype(compute_dtype)
        params = {n: p.astype(compute_dtype) for n, p in params.items()}

    B, S, D = x.shape
    assert D % heads == 0, "dims must be divisible by heads"
    hd = D // heads
    k_scale = float(hd) ** (-0.25)

    # ---- tiling ------------------------------------------------------------
    if block_s is None:
        block_s = min(S, 512)
    s_tiles = pl.cdiv(S, block_s)
    s_pad = s_tiles * block_s

    if block_n is None:
        block_n = D                                   # weight-resident (v5e/v6e default)
    assert D % block_n == 0 and block_n % hd == 0, "bad block_n"
    if block_n < D:
        assert block_n % 128 == 0, "output-feature tiles must be lane-aligned"
    n_tiles = D // block_n
    hn = block_n // hd                                # heads per output-feature tile

    # Pad ragged S up to a multiple of block_s instead of falling back to a full-S tile.
    if s_pad != S:
        x = jnp.pad(x, ((0, 0), (0, s_pad - S), (0, 0)))

    kernel = functools.partial(_kv_kernel, k_scale=k_scale, precision=precision)

    itemsize = jnp.dtype(x.dtype).itemsize
    cost = pl.CostEstimate(
        flops=4 * B * s_pad * D * D,                              # two [S,D]x[D,D] matmuls
        transcendentals=0,
        bytes_accessed=(n_tiles * B * s_pad * D                   # x (re-read per n tile)
                        + 2 * D * D + D                           # weights + bias (one pass)
                        + 2 * B * s_pad * D) * itemsize,          # k, v outputs
    )

    # Weights / bias: constant index_map when n_tiles == 1 -> single-buffer (Buffered(1));
    # default double-buffering only when they actually change along the n axis.
    w_mode = pl.Buffered(1) if n_tiles == 1 else None
    w_map = lambda n, b, s: (0, n)
    x_spec = pl.BlockSpec((1, block_s, D), lambda n, b, s: (b, s, 0))
    out_spec = pl.BlockSpec((1, hn, block_s, hd), lambda n, b, s: (b, n, s, 0))

    # VMEM budget for this tiling (+25% headroom, floored at the 32 MiB default).
    buf_w = 1 if n_tiles == 1 else 2
    working = (buf_w * 2 * D * block_n * itemsize                 # Wk + Wv (resident)
               + buf_w * block_n * itemsize                       # bv
               + 2 * block_s * D * itemsize                       # x tile (double-buffered)
               + 2 * 2 * block_s * block_n * itemsize             # k/v out tiles (double-buffered)
               + 4 * block_s * block_n * 4)                       # f32 accums + epilogue copies
    vmem_limit = int(min(max(working * 5 // 4, 32 * 2**20), 128 * 2**20))

    k_out, v_out = pl.pallas_call(
        kernel,
        out_shape=(
            jax.ShapeDtypeStruct((B, heads, s_pad, hd), x.dtype),
            jax.ShapeDtypeStruct((B, heads, s_pad, hd), x.dtype),
        ),
        grid_spec=pltpu.PrefetchScalarGridSpec(
            num_scalar_prefetch=0,
            grid=(n_tiles, B, s_tiles),         # n OUTERMOST: each weight slice DMA'd once
            in_specs=[
                x_spec,                                                       # x tile
                pl.BlockSpec((D, block_n), w_map, pipeline_mode=w_mode),      # Wk [in, out]
                pl.BlockSpec((D, block_n), w_map, pipeline_mode=w_mode),      # Wv [in, out]
                pl.BlockSpec((1, block_n), w_map, pipeline_mode=w_mode),      # bv
            ],
            out_specs=[out_spec, out_spec],
        ),
        compiler_params=pltpu.CompilerParams(
            dimension_semantics=("parallel", "parallel", "parallel"),
            vmem_limit_bytes=vmem_limit,
        ),
        cost_estimate=cost,
    )(x, params["wk"], params["wv"], params["bv"])

    if s_pad != S:
        k_out = k_out[:, :, :S, :]
        v_out = v_out[:, :, :S, :]
    return k_out, v_out


def init_params(key, dims, dtype=jnp.float32):
    """Deterministic init matching the PyTorch module: normal(std=0.02) weights, zero bias."""
    ks = jax.random.split(key, 2)
    std = 0.02
    # PyTorch nn.Linear weight is [out, in]; we store the transpose [in, out].
    wk = (jax.random.normal(ks[0], (dims, dims), jnp.float32) * std).T.astype(dtype)
    wv = (jax.random.normal(ks[1], (dims, dims), jnp.float32) * std).T.astype(dtype)
    bv = jnp.zeros((1, dims), dtype)
    return {"wk": wk, "wv": wv, "bv": bv}


def key_value_ref(x, params, heads):
    """Pure-JAX fp32 reference mirroring KeyValueModule.forward."""
    x = x.astype(jnp.float32)
    B, S, D = x.shape
    hd = D // heads
    scale = float(hd) ** (-0.25)
    k = x @ params["wk"].astype(jnp.float32)
    v = x @ params["wv"].astype(jnp.float32) + params["bv"].astype(jnp.float32)
    split = lambda t: t.reshape(B, S, heads, hd).transpose(0, 2, 1, 3)
    return split(k) * scale, split(v)


if __name__ == "__main__":
    B, S, D, H = 2, 8, 32, 4

    key = jax.random.PRNGKey(0)
    k_x, k_p, k_x2 = jax.random.split(key, 3)
    x = jax.random.normal(k_x, (B, S, D), jnp.float32)
    params = init_params(k_p, D, jnp.float32)

    # fp32 operands (the PyTorch module's default dtype).
    k_out, v_out = key_value(x, params, heads=H)
    k_out, v_out = jax.block_until_ready((k_out, v_out))
    k_ref, v_ref = key_value_ref(x, params, heads=H)
    assert k_out.shape == (B, H, S, D // H) and v_out.shape == (B, H, S, D // H)
    assert jnp.allclose(k_out, k_ref, atol=1e-5, rtol=1e-5), "K mismatch (fp32)"
    assert jnp.allclose(v_out, v_ref, atol=1e-5, rtol=1e-5), "V mismatch (fp32)"

    # Ragged sequence length -> exercises the S-padding path (S=12, block_s=8 -> padded to 16).
    S2 = 12
    x2 = jax.random.normal(k_x2, (B, S2, D), jnp.float32)
    k2, v2 = key_value(x2, params, heads=H, block_s=8)
    k2, v2 = jax.block_until_ready((k2, v2))
    k2_ref, v2_ref = key_value_ref(x2, params, heads=H)
    assert k2.shape == (B, H, S2, D // H) and v2.shape == (B, H, S2, D // H)
    assert jnp.allclose(k2, k2_ref, atol=1e-5, rtol=1e-5), "K mismatch (padded S)"
    assert jnp.allclose(v2, v2_ref, atol=1e-5, rtol=1e-5), "V mismatch (padded S)"

    # bf16 operands + f32 MXU accumulation (perf-preferred path, esp. on v5e).
    k_bf, v_bf = key_value(x, params, heads=H, compute_dtype=jnp.bfloat16)
    k_bf, v_bf = jax.block_until_ready((k_bf, v_bf))
    assert jnp.allclose(k_bf.astype(jnp.float32), k_ref, atol=2e-2, rtol=2e-2), "K mismatch (bf16)"
    assert jnp.allclose(v_bf.astype(jnp.float32), v_ref, atol=2e-2, rtol=2e-2), "V mismatch (bf16)"

    print("KERNEL_OK")
</pallas_src>

<mosaic_0001>
module attributes {stable_mosaic.version = 11 : i64} {
  func.func @_kv_kernel(%arg0: i32, %arg1: i32, %arg2: i32, %arg3: memref<1x8x32xf32, #tpu.memory_space<vmem>>, %arg4: memref<32x32xf32, #tpu.memory_space<vmem>>, %arg5: memref<32x32xf32, #tpu.memory_space<vmem>>, %arg6: memref<1x32xf32, #tpu.memory_space<vmem>>, %arg7: memref<1x4x8x8xf32, #tpu.memory_space<vmem>>, %arg8: memref<1x4x8x8xf32, #tpu.memory_space<vmem>>) attributes {dimension_semantics = [#tpu.dimension_semantics<parallel>, #tpu.dimension_semantics<parallel>, #tpu.dimension_semantics<parallel>], iteration_bounds = array<i64: 1, 2, 1>, scalar_prefetch = 0 : i64, scratch_operands = 0 : i64, tpu.core_type = #tpu.core_type<tc>, window_params = [{transform_indices = @transform_0, window_bounds = array<i64: 1, 8, 32>}, {pipeline_mode = #tpu.pipeline_mode<synchronous>, transform_indices = @transform_1, window_bounds = array<i64: 32, 32>}, {pipeline_mode = #tpu.pipeline_mode<synchronous>, transform_indices = @transform_2, window_bounds = array<i64: 32, 32>}, {pipeline_mode = #tpu.pipeline_mode<synchronous>, transform_indices = @transform_3, window_bounds = array<i64: 1, 32>}, {transform_indices = @transform_4, window_bounds = array<i64: 1, 4, 8, 8>}, {transform_indices = @transform_5, window_bounds = array<i64: 1, 4, 8, 8>}]} {
    %c0 = arith.constant 0 : index
    %c0_0 = arith.constant 0 : index
    %c0_1 = arith.constant 0 : index
    %0 = vector.load %arg3[%c0, %c0_0, %c0_1] : memref<1x8x32xf32, #tpu.memory_space<vmem>>, vector<1x8x32xf32>
    %1 = vector.shape_cast %0 : vector<1x8x32xf32> to vector<8x32xf32>
    %c0_2 = arith.constant 0 : index
    %c0_3 = arith.constant 0 : index
    %2 = vector.load %arg4[%c0_2, %c0_3] : memref<32x32xf32, #tpu.memory_space<vmem>>, vector<32x32xf32>
    %cst = arith.constant dense<0.000000e+00> : vector<8x32xf32>
    %3 = tpu.matmul %1, %2, %cst {dimension_numbers = #tpu.dot_dimension_numbers<[1], [0], [0], [1], [0, 0, 1, 1], [], []>} : vector<8x32xf32>, vector<32x32xf32>, vector<8x32xf32> -> vector<8x32xf32>
    %c0_4 = arith.constant 0 : index
    %c0_5 = arith.constant 0 : index
    %4 = vector.load %arg5[%c0_4, %c0_5] : memref<32x32xf32, #tpu.memory_space<vmem>>, vector<32x32xf32>
    %cst_6 = arith.constant dense<0.000000e+00> : vector<8x32xf32>
    %5 = tpu.matmul %1, %4, %cst_6 {dimension_numbers = #tpu.dot_dimension_numbers<[1], [0], [0], [1], [0, 0, 1, 1], [], []>} : vector<8x32xf32>, vector<32x32xf32>, vector<8x32xf32> -> vector<8x32xf32>
    %cst_7 = arith.constant 0.594603539 : f32
    %6 = vector.broadcast %cst_7 : f32 to vector<8x32xf32>
    %7 = arith.mulf %3, %6 : vector<8x32xf32>
    %c0_8 = arith.constant 0 : index
    %c0_9 = arith.constant 0 : index
    %8 = vector.load %arg6[%c0_8, %c0_9] : memref<1x32xf32, #tpu.memory_space<vmem>>, vector<1x32xf32>
    %9 = vector.broadcast %8 : vector<1x32xf32> to vector<8x32xf32>
    %10 = arith.addf %5, %9 : vector<8x32xf32>
    %11 = vector.extract_strided_slice %7 {offsets = [0, 0], sizes = [8, 8], strides = [1, 1]} : vector<8x32xf32> to vector<8x8xf32>
    %c0_10 = arith.constant 0 : index
    %c0_11 = arith.constant 0 : index
    %c0_12 = arith.constant 0 : index
    %c0_13 = arith.constant 0 : index
    %12 = vector.load %arg7[%c0_10, %c0_11, %c0_12, %c0_13] : memref<1x4x8x8xf32, #tpu.memory_space<vmem>>, vector<1x1x8x8xf32>
    %13 = vector.shape_cast %12 : vector<1x1x8x8xf32> to vector<8x8xf32>
    %14 = vector.shape_cast %11 : vector<8x8xf32> to vector<1x1x8x8xf32>
    tpu.vector_store %arg7[%c0_10, %c0_11, %c0_12, %c0_13], %14 {strides = array<i32>} : memref<1x4x8x8xf32, #tpu.memory_space<vmem>>, vector<1x1x8x8xf32>,
    %15 = vector.extract_strided_slice %10 {offsets = [0, 0], sizes = [8, 8], strides = [1, 1]} : vector<8x32xf32> to vector<8x8xf32>
    %c0_14 = arith.constant 0 : index
    %c0_15 = arith.constant 0 : index
    %c0_16 = arith.constant 0 : index
    %c0_17 = arith.constant 0 : index
    %16 = vector.load %arg8[%c0_14, %c0_15, %c0_16, %c0_17] : memref<1x4x8x8xf32, #tpu.memory_space<vmem>>, vector<1x1x8x8xf32>
    %17 = vector.shape_cast %16 : vector<1x1x8x8xf32> to vector<8x8xf32>
    %18 = vector.shape_cast %15 : vector<8x8xf32> to vector<1x1x8x8xf32>
    tpu.vector_store %arg8[%c0_14, %c0_15, %c0_16, %c0_17], %18 {strides = array<i32>} : memref<1x4x8x8xf32, #tpu.memory_space<vmem>>, vector<1x1x8x8xf32>,
    %19 = vector.extract_strided_slice %7 {offsets = [0, 8], sizes = [8, 8], strides = [1, 1]} : vector<8x32xf32> to vector<8x8xf32>
    %c0_18 = arith.constant 0 : index
    %c1 = arith.constant 1 : index
    %c0_19 = arith.constant 0 : index
    %c0_20 = arith.constant 0 : index
    %20 = vector.load %arg7[%c0_18, %c1, %c0_19, %c0_20] : memref<1x4x8x8xf32, #tpu.memory_space<vmem>>, vector<1x1x8x8xf32>
    %21 = vector.shape_cast %20 : vector<1x1x8x8xf32> to vector<8x8xf32>
    %22 = vector.shape_cast %19 : vector<8x8xf32> to vector<1x1x8x8xf32>
    tpu.vector_store %arg7[%c0_18, %c1, %c0_19, %c0_20], %22 {strides = array<i32>} : memref<1x4x8x8xf32, #tpu.memory_space<vmem>>, vector<1x1x8x8xf32>,
    %23 = vector.extract_strided_slice %10 {offsets = [0, 8], sizes = [8, 8], strides = [1, 1]} : vector<8x32xf32> to vector<8x8xf32>
    %c0_21 = arith.constant 0 : index
    %c1_22 = arith.constant 1 : index
    %c0_23 = arith.constant 0 : index
    %c0_24 = arith.constant 0 : index
    %24 = vector.load %arg8[%c0_21, %c1_22, %c0_23, %c0_24] : memref<1x4x8x8xf32, #tpu.memory_space<vmem>>, vector<1x1x8x8xf32>
    %25 = vector.shape_cast %24 : vector<1x1x8x8xf32> to vector<8x8xf32>
    %26 = vector.shape_cast %23 : vector<8x8xf32> to vector<1x1x8x8xf32>
    tpu.vector_store %arg8[%c0_21, %c1_22, %c0_23, %c0_24], %26 {strides = array<i32>} : memref<1x4x8x8xf32, #tpu.memory_space<vmem>>, vector<1x1x8x8xf32>,
    %27 = vector.extract_strided_slice %7 {offsets = [0, 16], sizes = [8, 8], strides = [1, 1]} : vector<8x32xf32> to vector<8x8xf32>
    %c0_25 = arith.constant 0 : index
    %c2 = arith.constant 2 : index
    %c0_26 = arith.constant 0 : index
    %c0_27 = arith.constant 0 : index
    %28 = vector.load %arg7[%c0_25, %c2, %c0_26, %c0_27] : memref<1x4x8x8xf32, #tpu.memory_space<vmem>>, vector<1x1x8x8xf32>
    %29 = vector.shape_cast %28 : vector<1x1x8x8xf32> to vector<8x8xf32>
    %30 = vector.shape_cast %27 : vector<8x8xf32> to vector<1x1x8x8xf32>
    tpu.vector_store %arg7[%c0_25, %c2, %c0_26, %c0_27], %30 {strides = array<i32>} : memref<1x4x8x8xf32, #tpu.memory_space<vmem>>, vector<1x1x8x8xf32>,
    %31 = vector.extract_strided_slice %10 {offsets = [0, 16], sizes = [8, 8], strides = [1, 1]} : vector<8x32xf32> to vector<8x8xf32>
    %c0_28 = arith.constant 0 : index
    %c2_29 = arith.constant 2 : index
    %c0_30 = arith.constant 0 : index
    %c0_31 = arith.constant 0 : index
    %32 = vector.load %arg8[%c0_28, %c2_29, %c0_30, %c0_31] : memref<1x4x8x8xf32, #tpu.memory_space<vmem>>, vector<1x1x8x8xf32>
    %33 = vector.shape_cast %32 : vector<1x1x8x8xf32> to vector<8x8xf32>
    %34 = vector.shape_cast %31 : vector<8x8xf32> to vector<1x1x8x8xf32>
    tpu.vector_store %arg8[%c0_28, %c2_29, %c0_30, %c0_31], %34 {strides = array<i32>} : memref<1x4x8x8xf32, #tpu.memory_space<vmem>>, vector<1x1x8x8xf32>,
    %35 = vector.extract_strided_slice %7 {offsets = [0, 24], sizes = [8, 8], strides = [1, 1]} : vector<8x32xf32> to vector<8x8xf32>
    %c0_32 = arith.constant 0 : index
    %c3 = arith.constant 3 : index
    %c0_33 = arith.constant 0 : index
    %c0_34 = arith.constant 0 : index
    %36 = vector.load %arg7[%c0_32, %c3, %c0_33, %c0_34] : memref<1x4x8x8xf32, #tpu.memory_space<vmem>>, vector<1x1x8x8xf32>
    %37 = vector.shape_cast %36 : vector<1x1x8x8xf32> to vector<8x8xf32>
    %38 = vector.shape_cast %35 : vector<8x8xf32> to vector<1x1x8x8xf32>
    tpu.vector_store %arg7[%c0_32, %c3, %c0_33, %c0_34], %38 {strides = array<i32>} : memref<1x4x8x8xf32, #tpu.memory_space<vmem>>, vector<1x1x8x8xf32>,
    %39 = vector.extract_strided_slice %10 {offsets = [0, 24], sizes = [8, 8], strides = [1, 1]} : vector<8x32xf32> to vector<8x8xf32>
    %c0_35 = arith.constant 0 : index
    %c3_36 = arith.constant 3 : index
    %c0_37 = arith.constant 0 : index
    %c0_38 = arith.constant 0 : index
    %40 = vector.load %arg8[%c0_35, %c3_36, %c0_37, %c0_38] : memref<1x4x8x8xf32, #tpu.memory_space<vmem>>, vector<1x1x8x8xf32>
    %41 = vector.shape_cast %40 : vector<1x1x8x8xf32> to vector<8x8xf32>
    %42 = vector.shape_cast %39 : vector<8x8xf32> to vector<1x1x8x8xf32>
    tpu.vector_store %arg8[%c0_35, %c3_36, %c0_37, %c0_38], %42 {strides = array<i32>} : memref<1x4x8x8xf32, #tpu.memory_space<vmem>>, vector<1x1x8x8xf32>,
    return
  }
  func.func @transform_0(%arg0: i32, %arg1: i32, %arg2: i32) -> (i32, i32, i32) {
    %c0_i32 = arith.constant 0 : i32
    %c0_i32_0 = arith.constant 0 : i32
    return %arg1, %arg2, %c0_i32 : i32, i32, i32
  }
  func.func @transform_1(%arg0: i32, %arg1: i32, %arg2: i32) -> (i32, i32) {
    %c0_i32 = arith.constant 0 : i32
    %c0_i32_0 = arith.constant 0 : i32
    return %c0_i32, %arg0 : i32, i32
  }
  func.func @transform_2(%arg0: i32, %arg1: i32, %arg2: i32) -> (i32, i32) {
    %c0_i32 = arith.constant 0 : i32
    %c0_i32_0 = arith.constant 0 : i32
    return %c0_i32, %arg0 : i32, i32
  }
  func.func @transform_3(%arg0: i32, %arg1: i32, %arg2: i32) -> (i32, i32) {
    %c0_i32 = arith.constant 0 : i32
    %c0_i32_0 = arith.constant 0 : i32
    return %c0_i32, %arg0 : i32, i32
  }
  func.func @transform_4(%arg0: i32, %arg1: i32, %arg2: i32) -> (i32, i32, i32, i32) {
    %c0_i32 = arith.constant 0 : i32
    %c0_i32_0 = arith.constant 0 : i32
    return %arg1, %arg0, %arg2, %c0_i32 : i32, i32, i32, i32
  }
  func.func @transform_5(%arg0: i32, %arg1: i32, %arg2: i32) -> (i32, i32, i32, i32) {
    %c0_i32 = arith.constant 0 : i32
    %c0_i32_0 = arith.constant 0 : i32
    return %arg1, %arg0, %arg2, %c0_i32 : i32, i32, i32, i32
  }
}

</mosaic_0001>

<llo_original>
// kernel: tpu_custom_call.1
$region0: #{tpu_custom_call.1}
  #allocation0 [shape = 'u32[]', space=smem, size = 0x4, offset = 0x4, fixed_abs, tag = 'smem constant byte address 0x4 - core index']
  #allocation1 [shape = 'u32[72,128]{1,0:T(1,128)}', space=vmem, size = 0x9000, scoped, tag = 'internal scratch']
  %s0 = inlined_call_operand.hbm [shape: f32[2,8,32], index: 0, kind: input, shape index: {}]
  %s1 = inlined_call_operand.hbm [shape: f32[32,32], index: 1, kind: input, shape index: {}]
  %s2 = inlined_call_operand.hbm [shape: f32[32,32], index: 2, kind: input, shape index: {}]
  %s3 = inlined_call_operand.vmem [shape: f32[1,32], index: 3, kind: input, shape index: {}]
  %s4 = inlined_call_operand.hbm [shape: f32[2,4,8,8], index: 4, kind: output, shape index: {0}]
  %s5 = inlined_call_operand.hbm [shape: f32[2,4,8,8], index: 5, kind: output, shape index: {1}]
  %6 = xla_tuple %s4, %s5
  %s7 = sld [smem:[#allocation0]]
  $region69: #{tpu_custom_call.1} parent=0
    _
  %s9 = ssub.s32 1, %s7
  %s10 = scalar_select 0, %s9, %s7
  $region1: #{tpu_custom_call.1} parent=0
    #allocation2 [shape = 'u8[8192]{0}', space=vmem, size = 0x2000, scoped, tag = 'input window, operand 0']
    #allocation3 [shape = 's32[2]{0}', space=sflag, size = 0x8, scoped, tag = 'scoped memory for tpu_custom_call.1']
    #allocation4 [shape = 's32[2]{0}', space=sflag, size = 0x8, scoped, tag = 'scoped memory for tpu_custom_call.1']
    #allocation5 [shape = 'u8[16384]{0}', space=vmem, size = 0x4000, scoped, tag = 'input window, operand 1, single buffered']
    #allocation6 [shape = 's32[1]{0}', space=sflag, size = 0x4, scoped, tag = 'scoped memory for tpu_custom_call.1']
    #allocation7 [shape = 'u8[16384]{0}', space=vmem, size = 0x4000, scoped, tag = 'input window, operand 2, single buffered']
    #allocation8 [shape = 'u8[32768]{0}', space=vmem, size = 0x8000, scoped, tag = 'output window, operand 0']
    #allocation9 [shape = 'u8[32768]{0}', space=vmem, size = 0x8000, scoped, tag = 'output window, operand 1']
    #allocation10 [shape = 's32[2]{0}', space=sflag, size = 0x8, scoped, tag = 'scoped memory for tpu_custom_call.1']
    %11 = vsyncpa [#allocation3], 0
    %s12 = scalar_lea.sflag [#allocation3], 1
    %13 = vsyncpa %s12, 0
    %14 = vsyncpa [#allocation6], 0
    %15 = vsyncpa [#allocation4], 0
    %s16 = scalar_lea.sflag [#allocation4], 1
    %17 = vsyncpa %s16, 0
    %18 = vsyncpa [#allocation10], 0
    %s19 = scalar_lea.sflag [#allocation10], 1
    %20 = vsyncpa %s19, 0
    loop: start=0, step=1, limit=4
    $region2: #{tpu_custom_call.1} parent=1 // loop_pre_header
      _
    $region3: #{tpu_custom_call.1} parent=1 // loop_header
      %s22 = sphi 0, %s26
      %p23 = scmp.ge.s32.totalorder %s22, 4
      %s29 = sphi 0, %s48
      %s30 = sphi 0, %s44
      %s31 = sphi 0, %s40
      %s32 = sphi 0, %s29
      %s33 = sphi 0, %s30
      %s34 = sphi 0, %s31
      %s35 = sphi 0, %s32
      %s36 = sphi 0, %s33
      %s37 = sphi 0, %s34
      %s53 = sphi 0, %s55
      %s56 = sphi 0, %s53
      %s57 = sphi 0, %s56
      %s73 = sphi 0, %s57
      %s79 = sphi 0, %s81
      %s82 = sphi 0, %s79
      %s83 = sphi 0, %s82
      %s99 = sphi 0, %s83
      %s105 = sphi 0, %s107
      %s108 = sphi 0, %s105
      %s109 = sphi 0, %s108
      %s125 = sphi 0, %s109
      %s131 = sphi 0, %s133
      %s134 = sphi 0, %s131
      %s135 = sphi 0, %s134
      %s151 = sphi 0, %s135
      %s161 = sphi 0, %s163
      %s164 = sphi 0, %s161
      %s165 = sphi 0, %s164
      %s181 = sphi 0, %s165
      %s191 = sphi 0, %s193
      %s194 = sphi 0, %s191
      %s195 = sphi 0, %s194
      %s211 = sphi 0, %s195
    $region4: #{tpu_custom_call.1} parent=1 // loop_header_branch
      %25 = sbr.rel (%p23) target = $region8
    $region5: #{tpu_custom_call.1} parent=1 // loop_body
      %s27 = ssub.s32 %s22, 1
      %s28 = ssub.s32 %s22, 2
      %s38 = sadd.s32 1, %s31
      %p39 = scmp.ge.s32.totalorder %s38, 1
      %s40 = scalar_select %p39, 0, %s38
      %s41 = sadd.s32 1, %s30
      %s42 = scalar_select %p39, %s41, %s30
      %p43 = scmp.ge.s32.totalorder %s42, 2
      %s44 = scalar_select %p43, 0, %s42
      %s45 = sadd.s32 1, %s29
      %s46 = scalar_select %p43, %s45, %s29
      %p47 = scmp.ge.s32.totalorder %s46, 1
      %s48 = scalar_select %p47, 0, %s46
      %s49 = ssub.s32 %s30, %s44
      %s50 = ssub.s32 %s31, %s40
      %s51 = sor.u32 %s49, %s50
      %p52 = scmp.eq.s32.totalorder %s51, 0
      %s54 = sadd.s32 %s53, 1
      %s55 = scalar_select %p52, %s53, %s54
      %p58 = pneg %p52
      %p59 = scmp.eq.s32.totalorder %s22, 1
      %p60 = por %p58, %p59
      %p61 = scmp.ne.s32.totalorder %s53, %s56
      %p62 = scmp.eq.s32.totalorder %s22, 0
      %p63 = por %p61, %p62
      %p64 = scmp.ne.s32.totalorder %s53, %s56
      %p65 = scmp.eq.s32.totalorder %s27, 1
      %p66 = por %p64, %p65
      %p67 = scmp.ne.s32.totalorder %s56, %s57
      %p68 = scmp.eq.s32.totalorder %s27, 0
      %p69 = por %p67, %p68
      %p70 = scmp.ne.s32.totalorder %s56, %s57
      %p71 = scmp.eq.s32.totalorder %s28, 1
      %p72 = por %p70, %p71
      %p74 = scmp.ne.s32.totalorder %s57, %s73
      %p75 = scmp.eq.s32.totalorder %s28, 0
      %p76 = por %p74, %p75
      %s77 = ssub.s32 %s29, %s48
      %p78 = scmp.eq.s32.totalorder %s77, 0
      %s80 = sadd.s32 %s79, 1
      %s81 = scalar_select %p78, %s79, %s80
      %p84 = pneg %p78
      %p85 = scmp.eq.s32.totalorder %s22, 1
      %p86 = por %p84, %p85
      %p87 = scmp.ne.s32.totalorder %s79, %s82
      %p88 = scmp.eq.s32.totalorder %s22, 0
      %p89 = por %p87, %p88
      %p90 = scmp.ne.s32.totalorder %s79, %s82
      %p91 = scmp.eq.s32.totalorder %s27, 1
      %p92 = por %p90, %p91
      %p93 = scmp.ne.s32.totalorder %s82, %s83
      %p94 = scmp.eq.s32.totalorder %s27, 0
      %p95 = por %p93, %p94
      %p96 = scmp.ne.s32.totalorder %s82, %s83
      %p97 = scmp.eq.s32.totalorder %s28, 1
      %p98 = por %p96, %p97
      %p100 = scmp.ne.s32.totalorder %s83, %s99
      %p101 = scmp.eq.s32.totalorder %s28, 0
      %p102 = por %p100, %p101
      %s103 = ssub.s32 %s29, %s48
      %p104 = scmp.eq.s32.totalorder %s103, 0
      %s106 = sadd.s32 %s105, 1
      %s107 = scalar_select %p104, %s105, %s106
      %p110 = pneg %p104
      %p111 = scmp.eq.s32.totalorder %s22, 1
      %p112 = por %p110, %p111
      %p113 = scmp.ne.s32.totalorder %s105, %s108
      %p114 = scmp.eq.s32.totalorder %s22, 0
      %p115 = por %p113, %p114
      %p116 = scmp.ne.s32.totalorder %s105, %s108
      %p117 = scmp.eq.s32.totalorder %s27, 1
      %p118 = por %p116, %p117
      %p119 = scmp.ne.s32.totalorder %s108, %s109
      %p120 = scmp.eq.s32.totalorder %s27, 0
      %p121 = por %p119, %p120
      %p122 = scmp.ne.s32.totalorder %s108, %s109
      %p123 = scmp.eq.s32.totalorder %s28, 1
      %p124 = por %p122, %p123
      %p126 = scmp.ne.s32.totalorder %s109, %s125
      %p127 = scmp.eq.s32.totalorder %s28, 0
      %p128 = por %p126, %p127
      %s129 = ssub.s32 %s29, %s48
      %p130 = scmp.eq.s32.totalorder %s129, 0
      %s132 = sadd.s32 %s131, 1
      %s133 = scalar_select %p130, %s131, %s132
      %p136 = pneg %p130
      %p137 = scmp.eq.s32.totalorder %s22, 1
      %p138 = por %p136, %p137
      %p139 = scmp.ne.s32.totalorder %s131, %s134
      %p140 = scmp.eq.s32.totalorder %s22, 0
      %p141 = por %p139, %p140
      %p142 = scmp.ne.s32.totalorder %s131, %s134
      %p143 = scmp.eq.s32.totalorder %s27, 1
      %p144 = por %p142, %p143
      %p145 = scmp.ne.s32.totalorder %s134, %s135
      %p146 = scmp.eq.s32.totalorder %s27, 0
      %p147 = por %p145, %p146
      %p148 = scmp.ne.s32.totalorder %s134, %s135
      %p149 = scmp.eq.s32.totalorder %s28, 1
      %p150 = por %p148, %p149
      %p152 = scmp.ne.s32.totalorder %s135, %s151
      %p153 = scmp.eq.s32.totalorder %s28, 0
      %p154 = por %p152, %p153
      %s155 = ssub.s32 %s30, %s44
      %s156 = ssub.s32 %s29, %s48
      %s157 = sor.u32 %s155, %s156
      %s158 = ssub.s32 %s31, %s40
      %s159 = sor.u32 %s157, %s158
      %p160 = scmp.eq.s32.totalorder %s159, 0
      %s162 = sadd.s32 %s161, 1
      %s163 = scalar_select %p160, %s161, %s162
      %p166 = pneg %p160
      %p167 = scmp.eq.s32.totalorder %s22, 1
      %p168 = por %p166, %p167
      %p169 = scmp.ne.s32.totalorder %s161, %s164
      %p170 = scmp.eq.s32.totalorder %s22, 0
      %p171 = por %p169, %p170
      %p172 = scmp.ne.s32.totalorder %s161, %s164
      %p173 = scmp.eq.s32.totalorder %s27, 1
      %p174 = por %p172, %p173
      %p175 = scmp.ne.s32.totalorder %s164, %s165
      %p176 = scmp.eq.s32.totalorder %s27, 0
      %p177 = por %p175, %p176
      %p178 = scmp.ne.s32.totalorder %s164, %s165
      %p179 = scmp.eq.s32.totalorder %s28, 1
      %p180 = por %p178, %p179
      %p182 = scmp.ne.s32.totalorder %s165, %s181
      %p183 = scmp.eq.s32.totalorder %s28, 0
      %p184 = por %p182, %p183
      %s185 = ssub.s32 %s30, %s44
      %s186 = ssub.s32 %s29, %s48
      %s187 = sor.u32 %s185, %s186
      %s188 = ssub.s32 %s31, %s40
      %s189 = sor.u32 %s187, %s188
      %p190 = scmp.eq.s32.totalorder %s189, 0
      %s192 = sadd.s32 %s191, 1
      %s193 = scalar_select %p190, %s191, %s192
      %p196 = pneg %p190
      %p197 = scmp.eq.s32.totalorder %s22, 1
      %p198 = por %p196, %p197
      %p199 = scmp.ne.s32.totalorder %s191, %s194
      %p200 = scmp.eq.s32.totalorder %s22, 0
      %p201 = por %p199, %p200
      %p202 = scmp.ne.s32.totalorder %s191, %s194
      %p203 = scmp.eq.s32.totalorder %s27, 1
      %p204 = por %p202, %p203
      %p205 = scmp.ne.s32.totalorder %s194, %s195
      %p206 = scmp.eq.s32.totalorder %s27, 0
      %p207 = por %p205, %p206
      %p208 = scmp.ne.s32.totalorder %s194, %s195
      %p209 = scmp.eq.s32.totalorder %s28, 1
      %p210 = por %p208, %p209
      %p212 = scmp.ne.s32.totalorder %s195, %s211
      %p213 = scmp.eq.s32.totalorder %s28, 0
      %p214 = por %p212, %p213
      %p215 = scmp.le.s32.totalorder 1, %s22
      %p216 = scmp.lt.s32.totalorder %s22, 3
      %p217 = pnand %p215, %p216
      %p218 = pneg %p217
      // Predicated region
      $region9: #{tpu_custom_call.1} parent=5 // pred_check
        _
      $region10: #{tpu_custom_call.1} parent=5 // pred_check_branch
        %220 = sbr.rel (%p217) target = $region12
      $region11: #{tpu_custom_call.1} parent=5 // pred_region
        %s221 = ssub.s32 %s22, 1
        // Predicated region
        $region13: #{tpu_custom_call.1} parent=11 // pred_check
          %p222 = pneg %p95
        $region14: #{tpu_custom_call.1} parent=11 // pred_check_branch
          %224 = sbr.rel (%p222) target = $region16
        $region15: #{tpu_custom_call.1} parent=11 // pred_region
          %226 = vsyncadd [#allocation6], 0
          %s227 = smul.addr %s32, 8
          %s228 = scalar_lea.hbm %s1, %s227
          %s229 = sshll.u32 %s228, 4
          %s230 = int_to_ptr.hbm [resolvable:$true] %s229
          %s231 = sshll.u32 [#allocation5], 4
          %s232 = int_to_ptr.vmem [resolvable:$true] %s231
          %237 = dma.hbm_to_vmem [thread:$0]  %s230, 512, %s232, [#allocation6], 128, 128, 8
        $region16: #{tpu_custom_call.1} parent=11 // pred_fallthru
          _
        // Predicated region
        $region17: #{tpu_custom_call.1} parent=11 // pred_check
          %p238 = pneg %p121
        $region18: #{tpu_custom_call.1} parent=11 // pred_check_branch
          %240 = sbr.rel (%p238) target = $region20
        $region19: #{tpu_custom_call.1} parent=11 // pred_region
          %242 = vsyncadd [#allocation6], 0
          %s243 = smul.addr %s32, 8
          %s244 = scalar_lea.hbm %s2, %s243
          %s245 = sshll.u32 %s244, 4
          %s246 = int_to_ptr.hbm [resolvable:$true] %s245
          %s247 = sshll.u32 [#allocation7], 4
          %s248 = int_to_ptr.vmem [resolvable:$true] %s247
          %253 = dma.hbm_to_vmem [thread:$0]  %s246, 512, %s248, [#allocation6], 128, 128, 8
        $region20: #{tpu_custom_call.1} parent=11 // pred_fallthru
          _
        // Predicated region
        $region21: #{tpu_custom_call.1} parent=11 // pred_check
          %p254 = pneg %p147
        $region22: #{tpu_custom_call.1} parent=11 // pred_check_branch
          %256 = sbr.rel (%p254) target = $region24
        $region23: #{tpu_custom_call.1} parent=11 // pred_region
          %p257 = scmp.lt.s32.totalorder %s32, 0
          %s258 = scalar_select %p257, %s32, 0
          %s259 = scalar_lea.vmem %s3, %s258
        $region24: #{tpu_custom_call.1} parent=11 // pred_fallthru
          _
      $region12: #{tpu_custom_call.1} parent=5 // pred_fallthru
        _
      %p260 = scmp.lt.s32.totalorder %s22, 2
      // Predicated region
      $region25: #{tpu_custom_call.1} parent=5 // pred_check
        %p261 = pneg %p260
      $region26: #{tpu_custom_call.1} parent=5 // pred_check_branch
        %263 = sbr.rel (%p261) target = $region28
      $region27: #{tpu_custom_call.1} parent=5 // pred_region
        // Predicated region
        $region29: #{tpu_custom_call.1} parent=27 // pred_check
          %p264 = pneg %p63
        $region30: #{tpu_custom_call.1} parent=27 // pred_check_branch
          %266 = sbr.rel (%p264) target = $region32
        $region31: #{tpu_custom_call.1} parent=27 // pred_region
          %s267 = sand.u32 %s53, 1
          %s268 = scalar_lea.sflag [#allocation3], %s267
          %s269 = sand.u32 %s53, 1
          %s270 = smul.addr %s269, 8
          %s271 = scalar_lea.vmem [#allocation2], %s270
          %273 = vsyncadd %s268, 0
          %s274 = sadd.s32 %s31, %s30
          %s275 = smul.addr %s274, 8
          %s276 = scalar_lea.hbm %s0, %s275
          %s278 = sshll.u32 %s276, 4
          %s279 = int_to_ptr.hbm [resolvable:$true] %s278
          %s280 = sshll.u32 %s271, 4
          %s281 = int_to_ptr.vmem [resolvable:$true] %s280
          %283 = dma.hbm_to_vmem [thread:$0]  %s279, 128, %s281, %s268
        $region32: #{tpu_custom_call.1} parent=27 // pred_fallthru
          _
      $region28: #{tpu_custom_call.1} parent=5 // pred_fallthru
        _
      %p284 = scmp.le.s32.totalorder 1, %s22
      %p285 = scmp.lt.s32.totalorder %s22, 3
      %p286 = pnand %p284, %p285
      %p287 = pneg %p286
      // Predicated region
      $region33: #{tpu_custom_call.1} parent=5 // pred_check
        _
      $region34: #{tpu_custom_call.1} parent=5 // pred_check_branch
        %289 = sbr.rel (%p286) target = $region36
      $region35: #{tpu_custom_call.1} parent=5 // pred_region
        %s290 = ssub.s32 %s22, 1
        %s291 = sand.u32 %s56, 1
        %s292 = scalar_lea.sflag [#allocation3], %s291
        %s293 = sand.u32 %s56, 1
        %s294 = smul.addr %s293, 8
        %s295 = scalar_lea.vmem [#allocation2], %s294
        // Predicated region
        $region37: #{tpu_custom_call.1} parent=35 // pred_check
          %p296 = pneg %p69
        $region38: #{tpu_custom_call.1} parent=35 // pred_check_branch
          %298 = sbr.rel (%p296) target = $region40
        $region39: #{tpu_custom_call.1} parent=35 // pred_region
          %300 = dma.done %s292, 128
        $region40: #{tpu_custom_call.1} parent=35 // pred_fallthru
          _
        // Predicated region
        $region41: #{tpu_custom_call.1} parent=35 // pred_check
          %p301 = pneg %p95
        $region42: #{tpu_custom_call.1} parent=35 // pred_check_branch
          %303 = sbr.rel (%p301) target = $region44
        $region43: #{tpu_custom_call.1} parent=35 // pred_region
          %305 = dma.done [#allocation6], 512
        $region44: #{tpu_custom_call.1} parent=35 // pred_fallthru
          _
        // Predicated region
        $region45: #{tpu_custom_call.1} parent=35 // pred_check
          %p306 = pneg %p121
        $region46: #{tpu_custom_call.1} parent=35 // pred_check_branch
          %308 = sbr.rel (%p306) target = $region48
        $region47: #{tpu_custom_call.1} parent=35 // pred_region
          %310 = dma.done [#allocation6], 512
        $region48: #{tpu_custom_call.1} parent=35 // pred_fallthru
          _
        %s311 = sand.u32 %s56, 1
        %s312 = scalar_lea.sflag [#allocation3], %s311
        %s313 = sand.u32 %s56, 1
        %s314 = smul.addr %s313, 8
        %s315 = scalar_lea.vmem [#allocation2], %s314
        %p316 = pneg %p69
        %p317 = pneg %p66
        %p318 = pneg %p95
        %p319 = pneg %p92
        %p320 = pneg %p121
        %p321 = pneg %p118
        %p322 = scmp.lt.s32.totalorder %s32, 0
        %s323 = scalar_select %p322, %s32, 0
        %s324 = scalar_lea.vmem %s3, %s323
        %p325 = pneg %p147
        %p326 = pneg %p144
        %p327 = pneg %p177
        %p328 = pneg %p174
        %s329 = sand.u32 %s164, 1
        %s330 = scalar_lea.sflag [#allocation4], %s329
        %s331 = sand.u32 %s164, 1
        %s332 = smul.addr %s331, 32
        %s333 = scalar_lea.vmem [#allocation8], %s332
        %p334 = pneg %p207
        %p335 = pneg %p204
        %s336 = sand.u32 %s194, 1
        %s337 = scalar_lea.sflag [#allocation10], %s336
        %s338 = sand.u32 %s194, 1
        %s339 = smul.addr %s338, 32
        %s340 = scalar_lea.vmem [#allocation9], %s339
        %p341 = scmp.lt.s32.totalorder %s32, 0
        %s342 = scalar_select %p341, %s32, 0
        %s343 = scalar_lea.vmem %s3, %s342
        %s344 = smul.u32 4, %s32
        %s345 = smul.u32 4, %s32
        %v346 = vld [vmem:[%s295] sm:$0xff]
        %v347 = vld [vmem:[#allocation5] sm:$0xff]
        %v348 = vld [vmem:[#allocation5 + $0x8] sm:$0xff]
        %v349 = vld [vmem:[#allocation5 + $0x10] sm:$0xff]
        %v350 = vld [vmem:[#allocation5 + $0x18] sm:$0xff]
        %vm351 = vcmask 261120
        %v353 = vsel %vm351, %v346, 0
        %355 = vmatpush.msra.mxu0 0.0
        %356 = vmatpush.msra.mxu0 0.0
        %357 = vmatpush.msra.mxu0 0.0
        %358 = vmatpush.msra.mxu0 0.0
        %359 = vmatpush.msra.mxu0 0.0
        %360 = vmatpush.msra.mxu0 0.0
        %361 = vmatpush.msra.mxu0 0.0
        %362 = vmatpush.msra.mxu0 0.0
        %363 = vmatpush.msra.mxu0 0.0
        %364 = vmatpush.msra.mxu0 0.0
        %365 = vmatpush.msra.mxu0 0.0
        %366 = vmatpush.msra.mxu0 0.0
        %367 = vmatpush.msra.mxu0 %v350
        %368 = vmatpush.msra.mxu0 %v349
        %369 = vmatpush.msra.mxu0 %v348
        %370 = vmatpush.msra.mxu0 %v347
        %371 = vmatmul.f32.gmra.mxu0 %v353
        %v372 = vpop.f32.mrf.mxu0
        %v373 = vadd.f32 0.0, %v372
        %374 = vdwg.mxu0
        %v375 = vld [vmem:[#allocation7] sm:$0xff]
        %v376 = vld [vmem:[#allocation7 + $0x8] sm:$0xff]
        %v377 = vld [vmem:[#allocation7 + $0x10] sm:$0xff]
        %v378 = vld [vmem:[#allocation7 + $0x18] sm:$0xff]
        %v379 = vmul.f32 %v373, 0.59460354
        %v380 = vld [vmem:[%s343] sm:$0x1]
        %v382 = vperm.slane %v380, 0
        %384 = vmatpush.msra.mxu0 0.0
        %385 = vmatpush.msra.mxu0 0.0
        %386 = vmatpush.msra.mxu0 0.0
        %387 = vmatpush.msra.mxu0 0.0
        %388 = vmatpush.msra.mxu0 0.0
        %389 = vmatpush.msra.mxu0 0.0
        %390 = vmatpush.msra.mxu0 0.0
        %391 = vmatpush.msra.mxu0 0.0
        %392 = vmatpush.msra.mxu0 0.0
        %393 = vmatpush.msra.mxu0 0.0
        %394 = vmatpush.msra.mxu0 0.0
        %395 = vmatpush.msra.mxu0 0.0
        %396 = vmatpush.msra.mxu0 %v378
        %397 = vmatpush.msra.mxu0 %v377
        %398 = vmatpush.msra.mxu0 %v376
        %399 = vmatpush.msra.mxu0 %v375
        %400 = vmatmul.f32.gmra.mxu0 %v353
        %v401 = vpop.f32.mrf.mxu0
        %v402 = vadd.f32 %v382, %v401
        %403 = vdwg.mxu0
        %vm404 = vcmask 64512
        %405 = vst.msk [vmem:[%s333] sm:$0xff] %vm404, %v379
        %406 = vst.msk [vmem:[%s340] sm:$0xff] %vm404, %v402
        %408 = vrot.lane.b32.xlu0 %v379, 120
        %v409 = vpop.permute.xlu0 %408
        %s411 = scalar_lea.vmem %s333, 8 [#allocation8]
        %412 = vst.msk [vmem:[%s411] sm:$0xff] %vm404, %v409
        %414 = vrot.lane.b32.xlu0 %v402, 120
        %v415 = vpop.permute.xlu0 %414
        %s417 = scalar_lea.vmem %s340, 8 [#allocation9]
        %418 = vst.msk [vmem:[%s417] sm:$0xff] %vm404, %v415
        %419 = vrot.lane.b32.xlu0 %v379, 112
        %v420 = vpop.permute.xlu0 %419
        %s422 = scalar_lea.vmem %s333, 16 [#allocation8]
        %423 = vst.msk [vmem:[%s422] sm:$0xff] %vm404, %v420
        %424 = vrot.lane.b32.xlu0 %v402, 112
        %v425 = vpop.permute.xlu0 %424
        %s427 = scalar_lea.vmem %s340, 16 [#allocation9]
        %428 = vst.msk [vmem:[%s427] sm:$0xff] %vm404, %v425
        %429 = vrot.lane.b32.xlu0 %v379, 104
        %v430 = vpop.permute.xlu0 %429
        %s432 = scalar_lea.vmem %s333, 24 [#allocation8]
        %433 = vst.msk [vmem:[%s432] sm:$0xff] %vm404, %v430
        %434 = vrot.lane.b32.xlu0 %v402, 104
        %v435 = vpop.permute.xlu0 %434
        %s437 = scalar_lea.vmem %s340, 24 [#allocation9]
        %438 = vst.msk [vmem:[%s437] sm:$0xff] %vm404, %v435
        %s439 = sand.u32 %s164, 1
        %s440 = scalar_lea.sflag [#allocation4], %s439
        %s441 = sand.u32 %s164, 1
        %s442 = smul.addr %s441, 32
        %s443 = scalar_lea.vmem [#allocation8], %s442
        %s444 = sand.u32 %s194, 1
        %s445 = scalar_lea.sflag [#allocation10], %s444
        %s446 = sand.u32 %s194, 1
        %s447 = smul.addr %s446, 32
        %s448 = scalar_lea.vmem [#allocation9], %s447
        // Predicated region
        $region49: #{tpu_custom_call.1} parent=35 // pred_check
          %p449 = pneg %p174
        $region50: #{tpu_custom_call.1} parent=35 // pred_check_branch
          %451 = sbr.rel (%p449) target = $region52
        $region51: #{tpu_custom_call.1} parent=35 // pred_region
          %s452 = smul.u32 4, %s32
          %454 = vsyncadd %s440, 0
          %s455 = sadd.s32 %s34, %s452
          %s456 = smul.addr %s33, 4
          %s457 = sadd.s32 %s455, %s456
          %s458 = smul.addr %s457, 8
          %s459 = scalar_lea.hbm %s4, %s458
          %s460 = sshll.u32 %s443, 4
          %s461 = int_to_ptr.vmem [resolvable:$true] %s460
          %s462 = sshll.u32 %s459, 4
          %s463 = int_to_ptr.hbm [resolvable:$true] %s462
          %468 = dma.vmem_to_hbm [thread:$0]  %s461, 512, %s463, %s440, 128, 128, 8
        $region52: #{tpu_custom_call.1} parent=35 // pred_fallthru
          _
        // Predicated region
        $region53: #{tpu_custom_call.1} parent=35 // pred_check
          %p469 = pneg %p204
        $region54: #{tpu_custom_call.1} parent=35 // pred_check_branch
          %471 = sbr.rel (%p469) target = $region56
        $region55: #{tpu_custom_call.1} parent=35 // pred_region
          %s472 = smul.u32 4, %s32
          %474 = vsyncadd %s445, 0
          %s475 = sadd.s32 %s34, %s472
          %s476 = smul.addr %s33, 4
          %s477 = sadd.s32 %s475, %s476
          %s478 = smul.addr %s477, 8
          %s479 = scalar_lea.hbm %s5, %s478
          %s480 = sshll.u32 %s448, 4
          %s481 = int_to_ptr.vmem [resolvable:$true] %s480
          %s482 = sshll.u32 %s479, 4
          %s483 = int_to_ptr.hbm [resolvable:$true] %s482
          %488 = dma.vmem_to_hbm [thread:$0]  %s481, 512, %s483, %s445, 128, 128, 8
        $region56: #{tpu_custom_call.1} parent=35 // pred_fallthru
          _
      $region36: #{tpu_custom_call.1} parent=5 // pred_fallthru
        _
      %p489 = scmp.le.s32.totalorder 2, %s22
      // Predicated region
      $region57: #{tpu_custom_call.1} parent=5 // pred_check
        %p490 = pneg %p489
      $region58: #{tpu_custom_call.1} parent=5 // pred_check_branch
        %492 = sbr.rel (%p490) target = $region60
      $region59: #{tpu_custom_call.1} parent=5 // pred_region
        %s493 = ssub.s32 %s22, 2
        // Predicated region
        $region61: #{tpu_custom_call.1} parent=59 // pred_check
          %p494 = pneg %p180
        $region62: #{tpu_custom_call.1} parent=59 // pred_check_branch
          %496 = sbr.rel (%p494) target = $region64
        $region63: #{tpu_custom_call.1} parent=59 // pred_region
          %s497 = sand.u32 %s165, 1
          %s498 = scalar_lea.sflag [#allocation4], %s497
          %s499 = sand.u32 %s165, 1
          %s500 = smul.addr %s499, 32
          %s501 = scalar_lea.vmem [#allocation8], %s500
          %503 = dma.done %s498, 512
        $region64: #{tpu_custom_call.1} parent=59 // pred_fallthru
          _
        // Predicated region
        $region65: #{tpu_custom_call.1} parent=59 // pred_check
          %p504 = pneg %p210
        $region66: #{tpu_custom_call.1} parent=59 // pred_check_branch
          %506 = sbr.rel (%p504) target = $region68
        $region67: #{tpu_custom_call.1} parent=59 // pred_region
          %s507 = sand.u32 %s195, 1
          %s508 = scalar_lea.sflag [#allocation10], %s507
          %s509 = sand.u32 %s195, 1
          %s510 = smul.addr %s509, 32
          %s511 = scalar_lea.vmem [#allocation9], %s510
          %513 = dma.done %s508, 512
        $region68: #{tpu_custom_call.1} parent=59 // pred_fallthru
          _
      $region60: #{tpu_custom_call.1} parent=5 // pred_fallthru
        _
    $region6: #{tpu_custom_call.1} parent=1 // loop_footer
      %s26 = sadd.s32 1, %s22
    $region7: #{tpu_custom_call.1} parent=1 // loop_footer_branch
      %21 = sbr.rel target = $region3
    $region8: #{tpu_custom_call.1} parent=1 // loop_exit
      _
    %514 = vsyncpa [#allocation3], 1
    %s515 = scalar_lea.sflag [#allocation3], 1
    %516 = vsyncpa %s515, 1
    %517 = vsyncpa [#allocation6], 1
    %518 = vsyncpa [#allocation4], 1
    %s519 = scalar_lea.sflag [#allocation4], 1
    %520 = vsyncpa %s519, 1
    %521 = vsyncpa [#allocation10], 1
    %s522 = scalar_lea.sflag [#allocation10], 1
    %523 = vsyncpa %s522, 1

</llo_original>
